<compile_context>
chip_gen: v6e
topology: v6e:2x2x1
jax: 0.10.0
libtpu: 0.0.40
codegen_flags: <defaults>
</compile_context>

<pallas_src>
import jax
import jax.numpy as jnp
from jax.experimental import pallas as pl
from jax.experimental.pallas import tpu as pltpu


def ws_kernel(x_ref, w_ref, b_ref, cw_ref, o_ref):
    # x_ref : (1, Cin, tm)   feature tile for one batch element (M on lanes)
    # w_ref : (4D, Cin)      all 4 deconv taps stacked: row = (kh*2+kw)*D + d
    # b_ref : (4D, 1)        deconv bias tiled over the 4 taps
    # cw_ref: (4K, 4D)       block-diagonal class weights: row = (kh*2+kw)*K + k
    # o_ref : (1, 4K, tm)    output tile (lane dense)
    h = jnp.dot(w_ref[...], x_ref[0], preferred_element_type=jnp.float32)
    h = jnp.maximum(h + b_ref[...], 0.0)            # bias + ReLU in f32
    h = h.astype(cw_ref.dtype)                       # no-op in f32 path
    o_ref[0] = jnp.dot(cw_ref[...], h,
                       preferred_element_type=jnp.float32).astype(o_ref.dtype)


def _pick_tile_m(hw, max_tm):
    """Largest multiple of 128 that divides hw and is <= max_tm (else hw itself)."""
    best = None
    t = 128
    while t <= min(hw, max_tm):
        if hw % t == 0:
            best = t
        t += 128
    return best if best is not None else hw


def weakly_supervised_pallas(features, weights, deconv_w, deconv_b,
                             n_classes, dim, *, max_tile_m=1024,
                             use_bf16=False):
    """features: (N, Cin, H, W) NCHW float32
       weights:  (n_classes, dim) float32 (PyTorch views it to (K, D, 1, 1))
       deconv_w: (Cin, dim, 2, 2)   (PyTorch ConvTranspose2d weight layout)
       deconv_b: (dim,)
       returns:  (N, n_classes, 2H, 2W) float32 (NCHW)"""
    N, Cin, H, W = features.shape
    D, K = dim, n_classes
    HW = H * W
    tm = _pick_tile_m(HW, max_tile_m)

    # Free reshape: spatial axis stays contiguous (lane-dense in the kernel).
    x3d = features.reshape(N, Cin, HW)

    # Stack the 4 taps along rows: W_all[(kh*2+kw)*D + d, c] = deconv_w[c, d, kh, kw]
    w_all = jnp.transpose(deconv_w, (2, 3, 1, 0)).reshape(4 * D, Cin)
    b_all = jnp.tile(deconv_b, 4).reshape(4 * D, 1).astype(jnp.float32)
    # Block-diagonal class weights: output row (tap*K + k) consumes h rows tap*D + d.
    cw_bd = jnp.kron(jnp.eye(4, dtype=weights.dtype), weights.reshape(K, D))

    compute_dtype = jnp.bfloat16 if use_bf16 else features.dtype
    x3d = x3d.astype(compute_dtype)
    w_all = w_all.astype(compute_dtype)
    cw_bd = cw_bd.astype(compute_dtype)

    grid = (N, HW // tm)

    cost = pl.CostEstimate(
        flops=int(2 * N * HW * (4 * D * Cin + 4 * K * 4 * D)),
        transcendentals=0,
        bytes_accessed=int(4 * (N * Cin * HW + N * 4 * K * HW
                                + 4 * D * Cin + 4 * D + 4 * K * 4 * D)),
    )

    z = pl.pallas_call(
        ws_kernel,
        out_shape=jax.ShapeDtypeStruct((N, 4 * K, HW), jnp.float32),
        grid=grid,
        in_specs=[
            pl.BlockSpec((1, Cin, tm), lambda n, m: (n, 0, m)),
            pl.BlockSpec((4 * D, Cin), lambda n, m: (0, 0)),
            pl.BlockSpec((4 * D, 1), lambda n, m: (0, 0)),
            pl.BlockSpec((4 * K, 4 * D), lambda n, m: (0, 0)),
        ],
        out_specs=pl.BlockSpec((1, 4 * K, tm), lambda n, m: (n, 0, m)),
        compiler_params=pltpu.CompilerParams(
            dimension_semantics=("parallel", "parallel"),
            vmem_limit_bytes=32 * 1024 * 1024,
        ),
        cost_estimate=cost,
    )(x3d, w_all, b_all, cw_bd)

    # Scatter the 4 taps into the 2x-upsampled grid (layout plumbing only):
    #   z[n, (kh*2+kw)*K + k, h*W + w]  ->  out[n, k, 2h+kh, 2w+kw]
    z = z.reshape(N, 2, 2, K, H, W)               # (n, kh, kw, k, h, w)
    z = jnp.transpose(z, (0, 3, 4, 1, 5, 2))      # (n, k, h, kh, w, kw)
    return z.reshape(N, K, 2 * H, 2 * W)


def reference_jax(features, weights, deconv_w, deconv_b, n_classes, dim):
    """Plain-JAX reference matching PyTorch semantics (for validation)."""
    N, Cin, H, W = features.shape
    # ConvTranspose2d k=2 s=2: out[n,d,2h+kh,2w+kw] = sum_c x[n,c,h,w]*W[c,d,kh,kw] + b[d]
    y = jnp.einsum('nchw,cdij->ndhiwj', features, deconv_w)      # (N,D,H,2,W,2)
    y = y.reshape(N, dim, 2 * H, 2 * W) + deconv_b[None, :, None, None]
    y = jnp.maximum(y, 0.0)
    cw = weights.reshape(n_classes, dim)
    return jnp.einsum('ndhw,kd->nkhw', y, cw)                    # 1x1 conv


if __name__ == "__main__":
    # Small deterministic example shapes (multi-tile grid: HW=1024, tm=512).
    N, Cin, H, W = 2, 8, 32, 32
    dim, n_classes = 32, 4

    key = jax.random.PRNGKey(0)
    k1, k2, k3, k4 = jax.random.split(key, 4)
    features = jax.random.normal(k1, (N, Cin, H, W), dtype=jnp.float32)
    weights = jax.random.normal(k2, (n_classes, dim), dtype=jnp.float32)
    deconv_w = jax.random.normal(k3, (Cin, dim, 2, 2), dtype=jnp.float32) * 0.1
    deconv_b = jax.random.normal(k4, (dim,), dtype=jnp.float32) * 0.1

    out = weakly_supervised_pallas(features, weights, deconv_w, deconv_b,
                                   n_classes, dim, max_tile_m=512)
    out = jax.block_until_ready(out)

    ref = reference_jax(features, weights, deconv_w, deconv_b, n_classes, dim)
    assert out.shape == (N, n_classes, 2 * H, 2 * W), out.shape
    assert jnp.allclose(out, ref, atol=1e-4, rtol=1e-4), "mismatch vs reference"

    print("KERNEL_OK")
</pallas_src>

<mosaic_0001>
module attributes {stable_mosaic.version = 11 : i64} {
  func.func @ws_kernel(%arg0: i32, %arg1: i32, %arg2: memref<1x8x512xf32, #tpu.memory_space<vmem>>, %arg3: memref<128x8xf32, #tpu.memory_space<vmem>>, %arg4: memref<128x1xf32, #tpu.memory_space<vmem>>, %arg5: memref<16x128xf32, #tpu.memory_space<vmem>>, %arg6: memref<1x16x512xf32, #tpu.memory_space<vmem>>) attributes {dimension_semantics = [#tpu.dimension_semantics<parallel>, #tpu.dimension_semantics<parallel>], iteration_bounds = array<i64: 2, 2>, scalar_prefetch = 0 : i64, scratch_operands = 0 : i64, tpu.core_type = #tpu.core_type<tc>, window_params = [{transform_indices = @transform_0, window_bounds = array<i64: 1, 8, 512>}, {pipeline_mode = #tpu.pipeline_mode<synchronous>, transform_indices = @transform_1, window_bounds = array<i64: 128, 8>}, {pipeline_mode = #tpu.pipeline_mode<synchronous>, transform_indices = @transform_2, window_bounds = array<i64: 128, 1>}, {pipeline_mode = #tpu.pipeline_mode<synchronous>, transform_indices = @transform_3, window_bounds = array<i64: 16, 128>}, {transform_indices = @transform_4, window_bounds = array<i64: 1, 16, 512>}]} {
    %c0 = arith.constant 0 : index
    %c0_0 = arith.constant 0 : index
    %0 = vector.load %arg3[%c0, %c0_0] : memref<128x8xf32, #tpu.memory_space<vmem>>, vector<128x8xf32>
    %c0_1 = arith.constant 0 : index
    %c0_2 = arith.constant 0 : index
    %c0_3 = arith.constant 0 : index
    %1 = vector.load %arg2[%c0_1, %c0_2, %c0_3] : memref<1x8x512xf32, #tpu.memory_space<vmem>>, vector<1x8x512xf32>
    %2 = vector.shape_cast %1 : vector<1x8x512xf32> to vector<8x512xf32>
    %cst = arith.constant dense<0.000000e+00> : vector<128x512xf32>
    %3 = tpu.matmul %0, %2, %cst {dimension_numbers = #tpu.dot_dimension_numbers<[1], [0], [0], [1], [0, 0, 1, 1], [], []>} : vector<128x8xf32>, vector<8x512xf32>, vector<128x512xf32> -> vector<128x512xf32>
    %c0_4 = arith.constant 0 : index
    %c0_5 = arith.constant 0 : index
    %4 = vector.load %arg4[%c0_4, %c0_5] : memref<128x1xf32, #tpu.memory_space<vmem>>, vector<128x1xf32>
    %5 = vector.broadcast %4 : vector<128x1xf32> to vector<128x512xf32>
    %6 = arith.addf %3, %5 : vector<128x512xf32>
    %cst_6 = arith.constant 0.000000e+00 : f32
    %7 = vector.broadcast %cst_6 : f32 to vector<128x512xf32>
    %8 = arith.maximumf %6, %7 : vector<128x512xf32>
    %c0_7 = arith.constant 0 : index
    %c0_8 = arith.constant 0 : index
    %9 = vector.load %arg5[%c0_7, %c0_8] : memref<16x128xf32, #tpu.memory_space<vmem>>, vector<16x128xf32>
    %cst_9 = arith.constant dense<0.000000e+00> : vector<16x512xf32>
    %10 = tpu.matmul %9, %8, %cst_9 {dimension_numbers = #tpu.dot_dimension_numbers<[1], [0], [0], [1], [0, 0, 1, 1], [], []>} : vector<16x128xf32>, vector<128x512xf32>, vector<16x512xf32> -> vector<16x512xf32>
    %c0_10 = arith.constant 0 : index
    %c0_11 = arith.constant 0 : index
    %c0_12 = arith.constant 0 : index
    %11 = vector.load %arg6[%c0_10, %c0_11, %c0_12] : memref<1x16x512xf32, #tpu.memory_space<vmem>>, vector<1x16x512xf32>
    %12 = vector.shape_cast %11 : vector<1x16x512xf32> to vector<16x512xf32>
    %13 = vector.shape_cast %10 : vector<16x512xf32> to vector<1x16x512xf32>
    tpu.vector_store %arg6[%c0_10, %c0_11, %c0_12], %13 {strides = array<i32>} : memref<1x16x512xf32, #tpu.memory_space<vmem>>, vector<1x16x512xf32>,
    return
  }
  func.func @transform_0(%arg0: i32, %arg1: i32) -> (i32, i32, i32) {
    %c0_i32 = arith.constant 0 : i32
    %c0_i32_0 = arith.constant 0 : i32
    return %arg0, %c0_i32, %arg1 : i32, i32, i32
  }
  func.func @transform_1(%arg0: i32, %arg1: i32) -> (i32, i32) {
    %c0_i32 = arith.constant 0 : i32
    %c0_i32_0 = arith.constant 0 : i32
    %c0_i32_1 = arith.constant 0 : i32
    return %c0_i32, %c0_i32_0 : i32, i32
  }
  func.func @transform_2(%arg0: i32, %arg1: i32) -> (i32, i32) {
    %c0_i32 = arith.constant 0 : i32
    %c0_i32_0 = arith.constant 0 : i32
    %c0_i32_1 = arith.constant 0 : i32
    return %c0_i32, %c0_i32_0 : i32, i32
  }
  func.func @transform_3(%arg0: i32, %arg1: i32) -> (i32, i32) {
    %c0_i32 = arith.constant 0 : i32
    %c0_i32_0 = arith.constant 0 : i32
    %c0_i32_1 = arith.constant 0 : i32
    return %c0_i32, %c0_i32_0 : i32, i32
  }
  func.func @transform_4(%arg0: i32, %arg1: i32) -> (i32, i32, i32) {
    %c0_i32 = arith.constant 0 : i32
    %c0_i32_0 = arith.constant 0 : i32
    return %arg0, %c0_i32, %arg1 : i32, i32, i32
  }
}

</mosaic_0001>

<llo_original>
// kernel: tpu_custom_call.1
$region0: #{tpu_custom_call.1}
  #allocation0 [shape = 'u32[]', space=smem, size = 0x4, offset = 0x4, fixed_abs, tag = 'smem constant byte address 0x4 - core index']
  #allocation1 [shape = 'u32[144,128]{1,0:T(1,128)}', space=vmem, size = 0x12000, scoped, tag = 'internal scratch']
  %s0 = inlined_call_operand.vmem [shape: f32[2,8,1024], index: 0, kind: input, shape index: {}]
  %s1 = inlined_call_operand.vmem [shape: f32[128,8], index: 1, kind: input, shape index: {}]
  %s2 = inlined_call_operand.vmem [shape: f32[128,1], index: 2, kind: input, shape index: {}]
  %s3 = inlined_call_operand.vmem [shape: f32[16,128], index: 3, kind: input, shape index: {}]
  %s4 = inlined_call_operand.hbm [shape: f32[2,16,1024], index: 4, kind: output, shape index: {}]
  %s5 = sld [smem:[#allocation0]]
  $region49: #{tpu_custom_call.1} parent=0
    _
  %s7 = ssub.s32 1, %s5
  %s8 = scalar_select 0, %s7, %s5
  $region1: #{tpu_custom_call.1} parent=0
    #allocation2 [shape = 'u8[65536]{0}', space=vmem, size = 0x10000, scoped, tag = 'output window, operand 0']
    #allocation3 [shape = 's32[2]{0}', space=sflag, size = 0x8, scoped, tag = 'scoped memory for tpu_custom_call.1']
    %9 = vsyncpa [#allocation3], 0
    %s10 = scalar_lea.sflag [#allocation3], 1
    %11 = vsyncpa %s10, 0
    loop: start=0, step=1, limit=6
    $region2: #{tpu_custom_call.1} parent=1 // loop_pre_header
      _
    $region3: #{tpu_custom_call.1} parent=1 // loop_header
      %s13 = sphi 0, %s17
      %p14 = scmp.ge.s32.totalorder %s13, 6
      %s20 = sphi 0, %s32
      %s21 = sphi 0, %s28
      %s22 = sphi 0, %s20
      %s23 = sphi 0, %s21
      %s24 = sphi 0, %s22
      %s25 = sphi 0, %s23
      %s37 = sphi 0, %s39
      %s40 = sphi 0, %s37
      %s41 = sphi 0, %s40
      %s57 = sphi 0, %s41
      %s61 = sphi 0, %s61
      %s63 = sphi 0, %s61
      %s64 = sphi 0, %s63
      %s78 = sphi 0, %s64
      %s82 = sphi 0, %s82
      %s84 = sphi 0, %s82
      %s85 = sphi 0, %s84
      %s99 = sphi 0, %s85
      %s103 = sphi 0, %s103
      %s105 = sphi 0, %s103
      %s106 = sphi 0, %s105
      %s120 = sphi 0, %s106
      %s128 = sphi 0, %s130
      %s131 = sphi 0, %s128
      %s132 = sphi 0, %s131
      %s148 = sphi 0, %s132
    $region4: #{tpu_custom_call.1} parent=1 // loop_header_branch
      %16 = sbr.rel (%p14) target = $region8
    $region5: #{tpu_custom_call.1} parent=1 // loop_body
      %s18 = ssub.s32 %s13, 1
      %s19 = ssub.s32 %s13, 2
      %s26 = sadd.s32 1, %s21
      %p27 = scmp.ge.s32.totalorder %s26, 2
      %s28 = scalar_select %p27, 0, %s26
      %s29 = sadd.s32 1, %s20
      %s30 = scalar_select %p27, %s29, %s20
      %p31 = scmp.ge.s32.totalorder %s30, 2
      %s32 = scalar_select %p31, 0, %s30
      %s33 = ssub.s32 %s20, %s32
      %s34 = ssub.s32 %s21, %s28
      %s35 = sor.u32 %s33, %s34
      %p36 = scmp.eq.s32.totalorder %s35, 0
      %s38 = sadd.s32 %s37, 1
      %s39 = scalar_select %p36, %s37, %s38
      %p42 = pneg %p36
      %p43 = scmp.eq.s32.totalorder %s13, 3
      %p44 = por %p42, %p43
      %p45 = scmp.ne.s32.totalorder %s37, %s40
      %p46 = scmp.eq.s32.totalorder %s13, 0
      %p47 = por %p45, %p46
      %p48 = scmp.ne.s32.totalorder %s37, %s40
      %p49 = scmp.eq.s32.totalorder %s18, 3
      %p50 = por %p48, %p49
      %p51 = scmp.ne.s32.totalorder %s40, %s41
      %p52 = scmp.eq.s32.totalorder %s18, 0
      %p53 = por %p51, %p52
      %p54 = scmp.ne.s32.totalorder %s40, %s41
      %p55 = scmp.eq.s32.totalorder %s19, 3
      %p56 = por %p54, %p55
      %p58 = scmp.ne.s32.totalorder %s41, %s57
      %p59 = scmp.eq.s32.totalorder %s19, 0
      %p60 = por %p58, %p59
      %s62 = sadd.s32 %s61, 1
      %p65 = scmp.eq.s32.totalorder %s13, 3
      %p66 = scmp.ne.s32.totalorder %s61, %s63
      %p67 = scmp.eq.s32.totalorder %s13, 0
      %p68 = por %p66, %p67
      %p69 = scmp.ne.s32.totalorder %s61, %s63
      %p70 = scmp.eq.s32.totalorder %s18, 3
      %p71 = por %p69, %p70
      %p72 = scmp.ne.s32.totalorder %s63, %s64
      %p73 = scmp.eq.s32.totalorder %s18, 0
      %p74 = por %p72, %p73
      %p75 = scmp.ne.s32.totalorder %s63, %s64
      %p76 = scmp.eq.s32.totalorder %s19, 3
      %p77 = por %p75, %p76
      %p79 = scmp.ne.s32.totalorder %s64, %s78
      %p80 = scmp.eq.s32.totalorder %s19, 0
      %p81 = por %p79, %p80
      %s83 = sadd.s32 %s82, 1
      %p86 = scmp.eq.s32.totalorder %s13, 3
      %p87 = scmp.ne.s32.totalorder %s82, %s84
      %p88 = scmp.eq.s32.totalorder %s13, 0
      %p89 = por %p87, %p88
      %p90 = scmp.ne.s32.totalorder %s82, %s84
      %p91 = scmp.eq.s32.totalorder %s18, 3
      %p92 = por %p90, %p91
      %p93 = scmp.ne.s32.totalorder %s84, %s85
      %p94 = scmp.eq.s32.totalorder %s18, 0
      %p95 = por %p93, %p94
      %p96 = scmp.ne.s32.totalorder %s84, %s85
      %p97 = scmp.eq.s32.totalorder %s19, 3
      %p98 = por %p96, %p97
      %p100 = scmp.ne.s32.totalorder %s85, %s99
      %p101 = scmp.eq.s32.totalorder %s19, 0
      %p102 = por %p100, %p101
      %s104 = sadd.s32 %s103, 1
      %p107 = scmp.eq.s32.totalorder %s13, 3
      %p108 = scmp.ne.s32.totalorder %s103, %s105
      %p109 = scmp.eq.s32.totalorder %s13, 0
      %p110 = por %p108, %p109
      %p111 = scmp.ne.s32.totalorder %s103, %s105
      %p112 = scmp.eq.s32.totalorder %s18, 3
      %p113 = por %p111, %p112
      %p114 = scmp.ne.s32.totalorder %s105, %s106
      %p115 = scmp.eq.s32.totalorder %s18, 0
      %p116 = por %p114, %p115
      %p117 = scmp.ne.s32.totalorder %s105, %s106
      %p118 = scmp.eq.s32.totalorder %s19, 3
      %p119 = por %p117, %p118
      %p121 = scmp.ne.s32.totalorder %s106, %s120
      %p122 = scmp.eq.s32.totalorder %s19, 0
      %p123 = por %p121, %p122
      %s124 = ssub.s32 %s20, %s32
      %s125 = ssub.s32 %s21, %s28
      %s126 = sor.u32 %s124, %s125
      %p127 = scmp.eq.s32.totalorder %s126, 0
      %s129 = sadd.s32 %s128, 1
      %s130 = scalar_select %p127, %s128, %s129
      %p133 = pneg %p127
      %p134 = scmp.eq.s32.totalorder %s13, 3
      %p135 = por %p133, %p134
      %p136 = scmp.ne.s32.totalorder %s128, %s131
      %p137 = scmp.eq.s32.totalorder %s13, 0
      %p138 = por %p136, %p137
      %p139 = scmp.ne.s32.totalorder %s128, %s131
      %p140 = scmp.eq.s32.totalorder %s18, 3
      %p141 = por %p139, %p140
      %p142 = scmp.ne.s32.totalorder %s131, %s132
      %p143 = scmp.eq.s32.totalorder %s18, 0
      %p144 = por %p142, %p143
      %p145 = scmp.ne.s32.totalorder %s131, %s132
      %p146 = scmp.eq.s32.totalorder %s19, 3
      %p147 = por %p145, %p146
      %p149 = scmp.ne.s32.totalorder %s132, %s148
      %p150 = scmp.eq.s32.totalorder %s19, 0
      %p151 = por %p149, %p150
      %p152 = scmp.le.s32.totalorder 1, %s13
      %p153 = scmp.lt.s32.totalorder %s13, 5
      %p154 = pnand %p152, %p153
      %p155 = pneg %p154
      // Predicated region
      $region9: #{tpu_custom_call.1} parent=5 // pred_check
        _
      $region10: #{tpu_custom_call.1} parent=5 // pred_check_branch
        %157 = sbr.rel (%p154) target = $region12
      $region11: #{tpu_custom_call.1} parent=5 // pred_region
        %s158 = ssub.s32 %s13, 1
        // Predicated region
        $region13: #{tpu_custom_call.1} parent=11 // pred_check
          %p159 = pneg %p74
        $region14: #{tpu_custom_call.1} parent=11 // pred_check_branch
          %161 = sbr.rel (%p159) target = $region16
        $region15: #{tpu_custom_call.1} parent=11 // pred_region
          _
        $region16: #{tpu_custom_call.1} parent=11 // pred_fallthru
          _
        // Predicated region
        $region17: #{tpu_custom_call.1} parent=11 // pred_check
          %p162 = pneg %p95
        $region18: #{tpu_custom_call.1} parent=11 // pred_check_branch
          %164 = sbr.rel (%p162) target = $region20
        $region19: #{tpu_custom_call.1} parent=11 // pred_region
          _
        $region20: #{tpu_custom_call.1} parent=11 // pred_fallthru
          _
        // Predicated region
        $region21: #{tpu_custom_call.1} parent=11 // pred_check
          %p165 = pneg %p116
        $region22: #{tpu_custom_call.1} parent=11 // pred_check_branch
          %167 = sbr.rel (%p165) target = $region24
        $region23: #{tpu_custom_call.1} parent=11 // pred_region
          _
        $region24: #{tpu_custom_call.1} parent=11 // pred_fallthru
          _
      $region12: #{tpu_custom_call.1} parent=5 // pred_fallthru
        _
      %p168 = scmp.lt.s32.totalorder %s13, 4
      // Predicated region
      $region25: #{tpu_custom_call.1} parent=5 // pred_check
        %p169 = pneg %p168
      $region26: #{tpu_custom_call.1} parent=5 // pred_check_branch
        %171 = sbr.rel (%p169) target = $region28
      $region27: #{tpu_custom_call.1} parent=5 // pred_region
        // Predicated region
        $region29: #{tpu_custom_call.1} parent=27 // pred_check
          %p172 = pneg %p47
        $region30: #{tpu_custom_call.1} parent=27 // pred_check_branch
          %174 = sbr.rel (%p172) target = $region32
        $region31: #{tpu_custom_call.1} parent=27 // pred_region
          %s175 = smul.u32 4, %s21
          %p176 = scmp.lt.s32.totalorder %s20, 1
          %s177 = scalar_select %p176, %s20, 1
          %p178 = scmp.lt.s32.totalorder %s175, 7
          %s179 = scalar_select %p178, %s175, 7
          %s180 = smul.addr %s177, 8
          %s181 = sadd.s32 %s179, %s180
          %s182 = smul.addr %s181, 8
          %s183 = scalar_lea.vmem %s0, %s182
          %s184 = smul.u32 4, %s21
        $region32: #{tpu_custom_call.1} parent=27 // pred_fallthru
          _
      $region28: #{tpu_custom_call.1} parent=5 // pred_fallthru
        _
      %p185 = scmp.le.s32.totalorder 1, %s13
      %p186 = scmp.lt.s32.totalorder %s13, 5
      %p187 = pnand %p185, %p186
      %p188 = pneg %p187
      // Predicated region
      $region33: #{tpu_custom_call.1} parent=5 // pred_check
        _
      $region34: #{tpu_custom_call.1} parent=5 // pred_check_branch
        %190 = sbr.rel (%p187) target = $region36
      $region35: #{tpu_custom_call.1} parent=5 // pred_region
        %s191 = ssub.s32 %s13, 1
        %s192 = smul.u32 4, %s23
        %p193 = scmp.lt.s32.totalorder %s22, 1
        %s194 = scalar_select %p193, %s22, 1
        %p195 = scmp.lt.s32.totalorder %s192, 7
        %s196 = scalar_select %p195, %s192, 7
        %s197 = smul.addr %s194, 8
        %s198 = sadd.s32 %s196, %s197
        %s199 = smul.addr %s198, 8
        %s200 = scalar_lea.vmem %s0, %s199
        %p201 = pneg %p53
        %p202 = pneg %p50
        %p203 = pneg %p74
        %p204 = pneg %p71
        %p205 = pneg %p95
        %p206 = pneg %p92
        %p207 = pneg %p116
        %p208 = pneg %p113
        %p209 = pneg %p144
        %p210 = pneg %p141
        %s211 = sand.u32 %s131, 1
        %s212 = scalar_lea.sflag [#allocation3], %s211
        %s213 = sand.u32 %s131, 1
        %s214 = smul.addr %s213, 64
        %s215 = scalar_lea.vmem [#allocation2], %s214
        %s216 = smul.u32 4, %s23
        %p217 = scmp.lt.s32.totalorder %s22, 1
        %s218 = scalar_select %p217, %s22, 1
        %p219 = scmp.lt.s32.totalorder %s216, 7
        %s220 = scalar_select %p219, %s216, 7
        %s221 = smul.addr %s218, 8
        %s222 = sadd.s32 %s220, %s221
        %s223 = smul.addr %s222, 8
        %s224 = scalar_lea.vmem %s0, %s223
        %s225 = smul.u32 4, %s23
        %s226 = smul.u32 4, %s23
        %v227 = vld [vmem:[%s1] sm:$0xff]
        %v228 = vld [vmem:[%s1 + $0x8] sm:$0xff]
        %v229 = vld [vmem:[%s1 + $0x10] sm:$0xff]
        %v230 = vld [vmem:[%s1 + $0x18] sm:$0xff]
        %v231 = vld [vmem:[%s1 + $0x20] sm:$0xff]
        %v232 = vld [vmem:[%s1 + $0x28] sm:$0xff]
        %v233 = vld [vmem:[%s1 + $0x30] sm:$0xff]
        %v234 = vld [vmem:[%s1 + $0x38] sm:$0xff]
        %v235 = vld [vmem:[%s1 + $0x40] sm:$0xff]
        %v236 = vld [vmem:[%s1 + $0x48] sm:$0xff]
        %v237 = vld [vmem:[%s1 + $0x50] sm:$0xff]
        %v238 = vld [vmem:[%s1 + $0x58] sm:$0xff]
        %v239 = vld [vmem:[%s1 + $0x60] sm:$0xff]
        %v240 = vld [vmem:[%s1 + $0x68] sm:$0xff]
        %v241 = vld [vmem:[%s1 + $0x70] sm:$0xff]
        %v242 = vld [vmem:[%s1 + $0x78] sm:$0xff]
        %v243 = vld [vmem:[%s224] sm:$0xff]
        %v244 = vld [vmem:[%s224 + $0x8] sm:$0xff]
        %v245 = vld [vmem:[%s224 + $0x10] sm:$0xff]
        %v246 = vld [vmem:[%s224 + $0x18] sm:$0xff]
        %v247 = vld [vmem:[%s2] sm:$0xff]
        %v248 = vld [vmem:[%s2 + $0x8] sm:$0xff]
        %v249 = vld [vmem:[%s2 + $0x10] sm:$0xff]
        %v250 = vld [vmem:[%s2 + $0x18] sm:$0xff]
        %v251 = vld [vmem:[%s2 + $0x20] sm:$0xff]
        %v252 = vld [vmem:[%s2 + $0x28] sm:$0xff]
        %v253 = vld [vmem:[%s2 + $0x30] sm:$0xff]
        %v254 = vld [vmem:[%s2 + $0x38] sm:$0xff]
        %v255 = vld [vmem:[%s2 + $0x40] sm:$0xff]
        %v256 = vld [vmem:[%s2 + $0x48] sm:$0xff]
        %v257 = vld [vmem:[%s2 + $0x50] sm:$0xff]
        %v258 = vld [vmem:[%s2 + $0x58] sm:$0xff]
        %v259 = vld [vmem:[%s2 + $0x60] sm:$0xff]
        %v260 = vld [vmem:[%s2 + $0x68] sm:$0xff]
        %v261 = vld [vmem:[%s2 + $0x70] sm:$0xff]
        %v262 = vld [vmem:[%s2 + $0x78] sm:$0xff]
        %264 = vset.pattern.permute.xlu0 0
        %265 = vperm.xlu0 %264, %v247
        %v266 = vpop.permute.xlu0 %265
        %269 = vset.pattern.permute.xlu0 0
        %270 = vperm.xlu0 %269, %v248
        %v271 = vpop.permute.xlu0 %270
        %274 = vset.pattern.permute.xlu0 0
        %275 = vperm.xlu0 %274, %v249
        %v276 = vpop.permute.xlu0 %275
        %279 = vset.pattern.permute.xlu0 0
        %280 = vperm.xlu0 %279, %v250
        %v281 = vpop.permute.xlu0 %280
        %284 = vset.pattern.permute.xlu0 0
        %285 = vperm.xlu0 %284, %v251
        %v286 = vpop.permute.xlu0 %285
        %289 = vset.pattern.permute.xlu0 0
        %290 = vperm.xlu0 %289, %v252
        %v291 = vpop.permute.xlu0 %290
        %294 = vset.pattern.permute.xlu0 0
        %295 = vperm.xlu0 %294, %v253
        %v296 = vpop.permute.xlu0 %295
        %299 = vset.pattern.permute.xlu0 0
        %300 = vperm.xlu0 %299, %v254
        %v301 = vpop.permute.xlu0 %300
        %304 = vset.pattern.permute.xlu0 0
        %305 = vperm.xlu0 %304, %v255
        %v306 = vpop.permute.xlu0 %305
        %309 = vset.pattern.permute.xlu0 0
        %310 = vperm.xlu0 %309, %v256
        %v311 = vpop.permute.xlu0 %310
        %314 = vset.pattern.permute.xlu0 0
        %315 = vperm.xlu0 %314, %v257
        %v316 = vpop.permute.xlu0 %315
        %319 = vset.pattern.permute.xlu0 0
        %320 = vperm.xlu0 %319, %v258
        %v321 = vpop.permute.xlu0 %320
        %324 = vset.pattern.permute.xlu0 0
        %325 = vperm.xlu0 %324, %v259
        %v326 = vpop.permute.xlu0 %325
        %329 = vset.pattern.permute.xlu0 0
        %330 = vperm.xlu0 %329, %v260
        %v331 = vpop.permute.xlu0 %330
        %334 = vset.pattern.permute.xlu0 0
        %335 = vperm.xlu0 %334, %v261
        %v336 = vpop.permute.xlu0 %335
        %339 = vset.pattern.permute.xlu0 0
        %340 = vperm.xlu0 %339, %v262
        %v341 = vpop.permute.xlu0 %340
        %vm343 = vcmask 64512
        %v345 = vsel %vm343, %v227, 0
        %v348 = vsel %vm343, %v228, 0
        %v351 = vsel %vm343, %v229, 0
        %v354 = vsel %vm343, %v230, 0
        %v357 = vsel %vm343, %v231, 0
        %v360 = vsel %vm343, %v232, 0
        %v363 = vsel %vm343, %v233, 0
        %v366 = vsel %vm343, %v234, 0
        %v369 = vsel %vm343, %v235, 0
        %v372 = vsel %vm343, %v236, 0
        %v375 = vsel %vm343, %v237, 0
        %v378 = vsel %vm343, %v238, 0
        %v381 = vsel %vm343, %v239, 0
        %v384 = vsel %vm343, %v240, 0
        %v387 = vsel %vm343, %v241, 0
        %v390 = vsel %vm343, %v242, 0
        %392 = vmatprep.subr.mxu0 0.0
        %393 = vmatpush1.msra.mxu0 0.0
        %394 = vmatprep.subr.mxu0 0.0
        %395 = vmatpush1.msra.mxu0 0.0
        %396 = vmatprep.subr.mxu0 0.0
        %397 = vmatpush1.msra.mxu0 0.0
        %398 = vmatprep.subr.mxu0 0.0
        %399 = vmatpush1.msra.mxu0 0.0
        %400 = vmatprep.subr.mxu0 0.0
        %401 = vmatpush1.msra.mxu0 0.0
        %402 = vmatprep.subr.mxu0 0.0
        %403 = vmatpush1.msra.mxu0 0.0
        %404 = vmatprep.subr.mxu0 0.0
        %405 = vmatpush1.msra.mxu0 0.0
        %406 = vmatprep.subr.mxu0 0.0
        %407 = vmatpush1.msra.mxu0 0.0
        %408 = vmatprep.subr.mxu0 0.0
        %409 = vmatpush1.msra.mxu0 0.0
        %410 = vmatprep.subr.mxu0 0.0
        %411 = vmatpush1.msra.mxu0 0.0
        %412 = vmatprep.subr.mxu0 0.0
        %413 = vmatpush1.msra.mxu0 0.0
        %414 = vmatprep.subr.mxu0 0.0
        %415 = vmatpush1.msra.mxu0 0.0
        %416 = vmatprep.subr.mxu0 0.0
        %417 = vmatpush1.msra.mxu0 0.0
        %418 = vmatprep.subr.mxu0 0.0
        %419 = vmatpush1.msra.mxu0 0.0
        %420 = vmatprep.subr.mxu0 0.0
        %421 = vmatpush1.msra.mxu0 0.0
        %422 = vmatprep.subr.mxu0 %v244
        %423 = vmatpush1.msra.mxu0 %v243
        %424 = vmatprep.subr.mxu0 0.0
        %425 = vmatpush2.msra.mxu0 0.0
        %426 = vmatprep.subr.mxu0 0.0
        %427 = vmatpush2.msra.mxu0 0.0
        %428 = vmatprep.subr.mxu0 0.0
        %429 = vmatpush2.msra.mxu0 0.0
        %430 = vmatprep.subr.mxu0 0.0
        %431 = vmatpush2.msra.mxu0 0.0
        %432 = vmatprep.subr.mxu0 0.0
        %433 = vmatpush2.msra.mxu0 0.0
        %434 = vmatprep.subr.mxu0 0.0
        %435 = vmatpush2.msra.mxu0 0.0
        %436 = vmatprep.subr.mxu0 0.0
        %437 = vmatpush2.msra.mxu0 0.0
        %438 = vmatprep.subr.mxu0 0.0
        %439 = vmatpush2.msra.mxu0 0.0
        %440 = vmatprep.subr.mxu0 0.0
        %441 = vmatpush2.msra.mxu0 0.0
        %442 = vmatprep.subr.mxu0 0.0
        %443 = vmatpush2.msra.mxu0 0.0
        %444 = vmatprep.subr.mxu0 0.0
        %445 = vmatpush2.msra.mxu0 0.0
        %446 = vmatprep.subr.mxu0 0.0
        %447 = vmatpush2.msra.mxu0 0.0
        %448 = vmatprep.subr.mxu0 0.0
        %449 = vmatpush2.msra.mxu0 0.0
        %450 = vmatprep.subr.mxu0 0.0
        %451 = vmatpush2.msra.mxu0 0.0
        %452 = vmatprep.subr.mxu0 0.0
        %453 = vmatpush2.msra.mxu0 0.0
        %454 = vmatprep.subr.mxu0 0.0
        %455 = vmatpush2.msra.mxu0 0.0
        %456 = vmatprep.mubr.f32.mxu0 0.0
        %457 = vmatmul.mubr.f32.gmra.mxu0 %v345
        %v458 = vpop.f32.mrf.mxu0
        %v459 = vadd.f32 %v266, %v458
        %v460 = vpop.f32.mrf.mxu0
        %v461 = vadd.f32 %v266, %v460
        %462 = vmatprep.mubr.f32.mxu0 0.0
        %463 = vmatmul.mubr.f32.gmra.mxu0 %v348
        %v464 = vpop.f32.mrf.mxu0
        %v465 = vadd.f32 %v271, %v464
        %v466 = vpop.f32.mrf.mxu0
        %v467 = vadd.f32 %v271, %v466
        %468 = vmatprep.mubr.f32.mxu0 0.0
        %469 = vmatmul.mubr.f32.gmra.mxu0 %v351
        %v470 = vpop.f32.mrf.mxu0
        %v471 = vadd.f32 %v276, %v470
        %v472 = vpop.f32.mrf.mxu0
        %v473 = vadd.f32 %v276, %v472
        %474 = vmatprep.mubr.f32.mxu0 0.0
        %475 = vmatmul.mubr.f32.gmra.mxu0 %v354
        %v476 = vpop.f32.mrf.mxu0
        %v477 = vadd.f32 %v281, %v476
        %v478 = vpop.f32.mrf.mxu0
        %v479 = vadd.f32 %v281, %v478
        %480 = vmatprep.mubr.f32.mxu0 0.0
        %481 = vmatmul.mubr.f32.gmra.mxu0 %v357
        %v482 = vpop.f32.mrf.mxu0
        %v483 = vadd.f32 %v286, %v482
        %v484 = vpop.f32.mrf.mxu0
        %v485 = vadd.f32 %v286, %v484
        %486 = vmatprep.mubr.f32.mxu0 0.0
        %487 = vmatmul.mubr.f32.gmra.mxu0 %v360
        %v488 = vpop.f32.mrf.mxu0
        %v489 = vadd.f32 %v291, %v488
        %v490 = vpop.f32.mrf.mxu0
        %v491 = vadd.f32 %v291, %v490
        %492 = vmatprep.mubr.f32.mxu0 0.0
        %493 = vmatmul.mubr.f32.gmra.mxu0 %v363
        %v494 = vpop.f32.mrf.mxu0
        %v495 = vadd.f32 %v296, %v494
        %v496 = vpop.f32.mrf.mxu0
        %v497 = vadd.f32 %v296, %v496
        %498 = vmatprep.mubr.f32.mxu0 0.0
        %499 = vmatmul.mubr.f32.gmra.mxu0 %v366
        %v500 = vpop.f32.mrf.mxu0
        %v501 = vadd.f32 %v301, %v500
        %v502 = vpop.f32.mrf.mxu0
        %v503 = vadd.f32 %v301, %v502
        %504 = vmatprep.mubr.f32.mxu0 0.0
        %505 = vmatmul.mubr.f32.gmra.mxu0 %v369
        %v506 = vpop.f32.mrf.mxu0
        %v507 = vadd.f32 %v306, %v506
        %v508 = vpop.f32.mrf.mxu0
        %v509 = vadd.f32 %v306, %v508
        %510 = vmatprep.mubr.f32.mxu0 0.0
        %511 = vmatmul.mubr.f32.gmra.mxu0 %v372
        %v512 = vpop.f32.mrf.mxu0
        %v513 = vadd.f32 %v311, %v512
        %v514 = vpop.f32.mrf.mxu0
        %v515 = vadd.f32 %v311, %v514
        %516 = vmatprep.mubr.f32.mxu0 0.0
        %517 = vmatmul.mubr.f32.gmra.mxu0 %v375
        %v518 = vpop.f32.mrf.mxu0
        %v519 = vadd.f32 %v316, %v518
        %v520 = vpop.f32.mrf.mxu0
        %v521 = vadd.f32 %v316, %v520
        %522 = vmatprep.mubr.f32.mxu0 0.0
        %523 = vmatmul.mubr.f32.gmra.mxu0 %v378
        %v524 = vpop.f32.mrf.mxu0
        %v525 = vadd.f32 %v321, %v524
        %v526 = vpop.f32.mrf.mxu0
        %v527 = vadd.f32 %v321, %v526
        %528 = vmatprep.mubr.f32.mxu0 0.0
        %529 = vmatmul.mubr.f32.gmra.mxu0 %v381
        %v530 = vpop.f32.mrf.mxu0
        %v531 = vadd.f32 %v326, %v530
        %v532 = vpop.f32.mrf.mxu0
        %v533 = vadd.f32 %v326, %v532
        %534 = vmatprep.mubr.f32.mxu0 0.0
        %535 = vmatmul.mubr.f32.gmra.mxu0 %v384
        %v536 = vpop.f32.mrf.mxu0
        %v537 = vadd.f32 %v331, %v536
        %v538 = vpop.f32.mrf.mxu0
        %v539 = vadd.f32 %v331, %v538
        %540 = vmatprep.mubr.f32.mxu0 0.0
        %541 = vmatmul.mubr.f32.gmra.mxu0 %v387
        %v542 = vpop.f32.mrf.mxu0
        %v543 = vadd.f32 %v336, %v542
        %v544 = vpop.f32.mrf.mxu0
        %v545 = vadd.f32 %v336, %v544
        %546 = vmatprep.mubr.f32.mxu0 0.0
        %547 = vmatmul.mubr.f32.gmra.mxu0 %v390
        %v548 = vpop.f32.mrf.mxu0
        %v549 = vadd.f32 %v341, %v548
        %v550 = vpop.f32.mrf.mxu0
        %v551 = vadd.f32 %v341, %v550
        %552 = vdwg.mxu0
        %553 = vmatprep.subr.mxu0 0.0
        %554 = vmatpush1.msra.mxu0 0.0
        %555 = vmatprep.subr.mxu0 0.0
        %556 = vmatpush1.msra.mxu0 0.0
        %557 = vmatprep.subr.mxu0 0.0
        %558 = vmatpush1.msra.mxu0 0.0
        %559 = vmatprep.subr.mxu0 0.0
        %560 = vmatpush1.msra.mxu0 0.0
        %561 = vmatprep.subr.mxu0 0.0
        %562 = vmatpush1.msra.mxu0 0.0
        %563 = vmatprep.subr.mxu0 0.0
        %564 = vmatpush1.msra.mxu0 0.0
        %565 = vmatprep.subr.mxu0 0.0
        %566 = vmatpush1.msra.mxu0 0.0
        %567 = vmatprep.subr.mxu0 0.0
        %568 = vmatpush1.msra.mxu0 0.0
        %569 = vmatprep.subr.mxu0 0.0
        %570 = vmatpush1.msra.mxu0 0.0
        %571 = vmatprep.subr.mxu0 0.0
        %572 = vmatpush1.msra.mxu0 0.0
        %573 = vmatprep.subr.mxu0 0.0
        %574 = vmatpush1.msra.mxu0 0.0
        %575 = vmatprep.subr.mxu0 0.0
        %576 = vmatpush1.msra.mxu0 0.0
        %577 = vmatprep.subr.mxu0 0.0
        %578 = vmatpush1.msra.mxu0 0.0
        %579 = vmatprep.subr.mxu0 0.0
        %580 = vmatpush1.msra.mxu0 0.0
        %581 = vmatprep.subr.mxu0 0.0
        %582 = vmatpush1.msra.mxu0 0.0
        %583 = vmatprep.subr.mxu0 %v246
        %584 = vmatpush1.msra.mxu0 %v245
        %585 = vmatprep.subr.mxu0 0.0
        %586 = vmatpush2.msra.mxu0 0.0
        %587 = vmatprep.subr.mxu0 0.0
        %588 = vmatpush2.msra.mxu0 0.0
        %589 = vmatprep.subr.mxu0 0.0
        %590 = vmatpush2.msra.mxu0 0.0
        %591 = vmatprep.subr.mxu0 0.0
        %592 = vmatpush2.msra.mxu0 0.0
        %593 = vmatprep.subr.mxu0 0.0
        %594 = vmatpush2.msra.mxu0 0.0
        %595 = vmatprep.subr.mxu0 0.0
        %596 = vmatpush2.msra.mxu0 0.0
        %597 = vmatprep.subr.mxu0 0.0
        %598 = vmatpush2.msra.mxu0 0.0
        %599 = vmatprep.subr.mxu0 0.0
        %600 = vmatpush2.msra.mxu0 0.0
        %601 = vmatprep.subr.mxu0 0.0
        %602 = vmatpush2.msra.mxu0 0.0
        %603 = vmatprep.subr.mxu0 0.0
        %604 = vmatpush2.msra.mxu0 0.0
        %605 = vmatprep.subr.mxu0 0.0
        %606 = vmatpush2.msra.mxu0 0.0
        %607 = vmatprep.subr.mxu0 0.0
        %608 = vmatpush2.msra.mxu0 0.0
        %609 = vmatprep.subr.mxu0 0.0
        %610 = vmatpush2.msra.mxu0 0.0
        %611 = vmatprep.subr.mxu0 0.0
        %612 = vmatpush2.msra.mxu0 0.0
        %613 = vmatprep.subr.mxu0 0.0
        %614 = vmatpush2.msra.mxu0 0.0
        %615 = vmatprep.subr.mxu0 0.0
        %616 = vmatpush2.msra.mxu0 0.0
        %617 = vmatprep.mubr.f32.mxu0 0.0
        %618 = vmatmul.mubr.f32.gmra.mxu0 %v345
        %v619 = vpop.f32.mrf.mxu0
        %v620 = vadd.f32 %v266, %v619
        %v621 = vpop.f32.mrf.mxu0
        %v622 = vadd.f32 %v266, %v621
        %623 = vmatprep.mubr.f32.mxu0 0.0
        %624 = vmatmul.mubr.f32.gmra.mxu0 %v348
        %v625 = vpop.f32.mrf.mxu0
        %v626 = vadd.f32 %v271, %v625
        %v627 = vpop.f32.mrf.mxu0
        %v628 = vadd.f32 %v271, %v627
        %629 = vmatprep.mubr.f32.mxu0 0.0
        %630 = vmatmul.mubr.f32.gmra.mxu0 %v351
        %v631 = vpop.f32.mrf.mxu0
        %v632 = vadd.f32 %v276, %v631
        %v633 = vpop.f32.mrf.mxu0
        %v634 = vadd.f32 %v276, %v633
        %635 = vmatprep.mubr.f32.mxu0 0.0
        %636 = vmatmul.mubr.f32.gmra.mxu0 %v354
        %v637 = vpop.f32.mrf.mxu0
        %v638 = vadd.f32 %v281, %v637
        %v639 = vpop.f32.mrf.mxu0
        %v640 = vadd.f32 %v281, %v639
        %641 = vmatprep.mubr.f32.mxu0 0.0
        %642 = vmatmul.mubr.f32.gmra.mxu0 %v357
        %v643 = vpop.f32.mrf.mxu0
        %v644 = vadd.f32 %v286, %v643
        %v645 = vpop.f32.mrf.mxu0
        %v646 = vadd.f32 %v286, %v645
        %647 = vmatprep.mubr.f32.mxu0 0.0
        %648 = vmatmul.mubr.f32.gmra.mxu0 %v360
        %v649 = vpop.f32.mrf.mxu0
        %v650 = vadd.f32 %v291, %v649
        %v651 = vpop.f32.mrf.mxu0
        %v652 = vadd.f32 %v291, %v651
        %653 = vmatprep.mubr.f32.mxu0 0.0
        %654 = vmatmul.mubr.f32.gmra.mxu0 %v363
        %v655 = vpop.f32.mrf.mxu0
        %v656 = vadd.f32 %v296, %v655
        %v657 = vpop.f32.mrf.mxu0
        %v658 = vadd.f32 %v296, %v657
        %659 = vmatprep.mubr.f32.mxu0 0.0
        %660 = vmatmul.mubr.f32.gmra.mxu0 %v366
        %v661 = vpop.f32.mrf.mxu0
        %v662 = vadd.f32 %v301, %v661
        %v663 = vpop.f32.mrf.mxu0
        %v664 = vadd.f32 %v301, %v663
        %665 = vmatprep.mubr.f32.mxu0 0.0
        %666 = vmatmul.mubr.f32.gmra.mxu0 %v369
        %v667 = vpop.f32.mrf.mxu0
        %v668 = vadd.f32 %v306, %v667
        %v669 = vpop.f32.mrf.mxu0
        %v670 = vadd.f32 %v306, %v669
        %671 = vmatprep.mubr.f32.mxu0 0.0
        %672 = vmatmul.mubr.f32.gmra.mxu0 %v372
        %v673 = vpop.f32.mrf.mxu0
        %v674 = vadd.f32 %v311, %v673
        %v675 = vpop.f32.mrf.mxu0
        %v676 = vadd.f32 %v311, %v675
        %677 = vmatprep.mubr.f32.mxu0 0.0
        %678 = vmatmul.mubr.f32.gmra.mxu0 %v375
        %v679 = vpop.f32.mrf.mxu0
        %v680 = vadd.f32 %v316, %v679
        %v681 = vpop.f32.mrf.mxu0
        %v682 = vadd.f32 %v316, %v681
        %683 = vmatprep.mubr.f32.mxu0 0.0
        %684 = vmatmul.mubr.f32.gmra.mxu0 %v378
        %v685 = vpop.f32.mrf.mxu0
        %v686 = vadd.f32 %v321, %v685
        %v687 = vpop.f32.mrf.mxu0
        %v688 = vadd.f32 %v321, %v687
        %689 = vmatprep.mubr.f32.mxu0 0.0
        %690 = vmatmul.mubr.f32.gmra.mxu0 %v381
        %v691 = vpop.f32.mrf.mxu0
        %v692 = vadd.f32 %v326, %v691
        %v693 = vpop.f32.mrf.mxu0
        %v694 = vadd.f32 %v326, %v693
        %695 = vmatprep.mubr.f32.mxu0 0.0
        %696 = vmatmul.mubr.f32.gmra.mxu0 %v384
        %v697 = vpop.f32.mrf.mxu0
        %v698 = vadd.f32 %v331, %v697
        %v699 = vpop.f32.mrf.mxu0
        %v700 = vadd.f32 %v331, %v699
        %701 = vmatprep.mubr.f32.mxu0 0.0
        %702 = vmatmul.mubr.f32.gmra.mxu0 %v387
        %v703 = vpop.f32.mrf.mxu0
        %v704 = vadd.f32 %v336, %v703
        %v705 = vpop.f32.mrf.mxu0
        %v706 = vadd.f32 %v336, %v705
        %707 = vmatprep.mubr.f32.mxu0 0.0
        %708 = vmatmul.mubr.f32.gmra.mxu0 %v390
        %v709 = vpop.f32.mrf.mxu0
        %v710 = vadd.f32 %v341, %v709
        %v711 = vpop.f32.mrf.mxu0
        %v712 = vadd.f32 %v341, %v711
        %713 = vdwg.mxu0
        %v714 = vmax.f32 %v459, 0.0
        %v715 = vmax.f32 %v461, 0.0
        %v716 = vmax.f32 %v620, 0.0
        %v717 = vmax.f32 %v622, 0.0
        %v718 = vmax.f32 %v465, 0.0
        %v719 = vmax.f32 %v467, 0.0
        %v720 = vmax.f32 %v626, 0.0
        %v721 = vmax.f32 %v628, 0.0
        %v722 = vmax.f32 %v471, 0.0
        %v723 = vmax.f32 %v473, 0.0
        %v724 = vmax.f32 %v632, 0.0
        %v725 = vmax.f32 %v634, 0.0
        %v726 = vmax.f32 %v477, 0.0
        %v727 = vmax.f32 %v479, 0.0
        %v728 = vmax.f32 %v638, 0.0
        %v729 = vmax.f32 %v640, 0.0
        %v730 = vmax.f32 %v483, 0.0
        %v731 = vmax.f32 %v485, 0.0
        %v732 = vmax.f32 %v644, 0.0
        %v733 = vmax.f32 %v646, 0.0
        %v734 = vmax.f32 %v489, 0.0
        %v735 = vmax.f32 %v491, 0.0
        %v736 = vmax.f32 %v650, 0.0
        %v737 = vmax.f32 %v652, 0.0
        %v738 = vmax.f32 %v495, 0.0
        %v739 = vmax.f32 %v497, 0.0
        %v740 = vmax.f32 %v656, 0.0
        %v741 = vmax.f32 %v658, 0.0
        %v742 = vmax.f32 %v501, 0.0
        %v743 = vmax.f32 %v503, 0.0
        %v744 = vmax.f32 %v662, 0.0
        %v745 = vmax.f32 %v664, 0.0
        %v746 = vmax.f32 %v507, 0.0
        %v747 = vmax.f32 %v509, 0.0
        %v748 = vmax.f32 %v668, 0.0
        %v749 = vmax.f32 %v670, 0.0
        %v750 = vmax.f32 %v513, 0.0
        %v751 = vmax.f32 %v515, 0.0
        %v752 = vmax.f32 %v674, 0.0
        %v753 = vmax.f32 %v676, 0.0
        %v754 = vmax.f32 %v519, 0.0
        %v755 = vmax.f32 %v521, 0.0
        %v756 = vmax.f32 %v680, 0.0
        %v757 = vmax.f32 %v682, 0.0
        %v758 = vmax.f32 %v525, 0.0
        %v759 = vmax.f32 %v527, 0.0
        %v760 = vmax.f32 %v686, 0.0
        %v761 = vmax.f32 %v688, 0.0
        %v762 = vmax.f32 %v531, 0.0
        %v763 = vmax.f32 %v533, 0.0
        %v764 = vmax.f32 %v692, 0.0
        %v765 = vmax.f32 %v694, 0.0
        %v766 = vmax.f32 %v537, 0.0
        %v767 = vmax.f32 %v539, 0.0
        %v768 = vmax.f32 %v698, 0.0
        %v769 = vmax.f32 %v700, 0.0
        %v770 = vmax.f32 %v543, 0.0
        %v771 = vmax.f32 %v545, 0.0
        %v772 = vmax.f32 %v704, 0.0
        %v773 = vmax.f32 %v706, 0.0
        %v774 = vmax.f32 %v549, 0.0
        %v775 = vmax.f32 %v551, 0.0
        %v776 = vmax.f32 %v710, 0.0
        %v777 = vmax.f32 %v712, 0.0
        %v778 = vld [vmem:[%s3] sm:$0xff]
        %v779 = vld [vmem:[%s3 + $0x8] sm:$0xff]
        %780 = vmatprep.subr.mxu0 %v775
        %781 = vmatpush1.msra.mxu0 %v774
        %782 = vmatprep.subr.mxu0 %v771
        %783 = vmatpush1.msra.mxu0 %v770
        %784 = vmatprep.subr.mxu0 %v767
        %785 = vmatpush1.msra.mxu0 %v766
        %786 = vmatprep.subr.mxu0 %v763
        %787 = vmatpush1.msra.mxu0 %v762
        %788 = vmatprep.subr.mxu0 %v759
        %789 = vmatpush1.msra.mxu0 %v758
        %790 = vmatprep.subr.mxu0 %v755
        %791 = vmatpush1.msra.mxu0 %v754
        %792 = vmatprep.subr.mxu0 %v751
        %793 = vmatpush1.msra.mxu0 %v750
        %794 = vmatprep.subr.mxu0 %v747
        %795 = vmatpush1.msra.mxu0 %v746
        %796 = vmatprep.subr.mxu0 %v743
        %797 = vmatpush1.msra.mxu0 %v742
        %798 = vmatprep.subr.mxu0 %v739
        %799 = vmatpush1.msra.mxu0 %v738
        %800 = vmatprep.subr.mxu0 %v735
        %801 = vmatpush1.msra.mxu0 %v734
        %802 = vmatprep.subr.mxu0 %v731
        %803 = vmatpush1.msra.mxu0 %v730
        %804 = vmatprep.subr.mxu0 %v727
        %805 = vmatpush1.msra.mxu0 %v726
        %806 = vmatprep.subr.mxu0 %v723
        %807 = vmatpush1.msra.mxu0 %v722
        %808 = vmatprep.subr.mxu0 %v719
        %809 = vmatpush1.msra.mxu0 %v718
        %810 = vmatprep.subr.mxu0 %v715
        %811 = vmatpush1.msra.mxu0 %v714
        %812 = vmatprep.subr.mxu0 0.0
        %813 = vmatpush2.msra.mxu0 0.0
        %814 = vmatprep.subr.mxu0 0.0
        %815 = vmatpush2.msra.mxu0 0.0
        %816 = vmatprep.subr.mxu0 0.0
        %817 = vmatpush2.msra.mxu0 0.0
        %818 = vmatprep.subr.mxu0 0.0
        %819 = vmatpush2.msra.mxu0 0.0
        %820 = vmatprep.subr.mxu0 0.0
        %821 = vmatpush2.msra.mxu0 0.0
        %822 = vmatprep.subr.mxu0 0.0
        %823 = vmatpush2.msra.mxu0 0.0
        %824 = vmatprep.subr.mxu0 0.0
        %825 = vmatpush2.msra.mxu0 0.0
        %826 = vmatprep.subr.mxu0 0.0
        %827 = vmatpush2.msra.mxu0 0.0
        %828 = vmatprep.subr.mxu0 0.0
        %829 = vmatpush2.msra.mxu0 0.0
        %830 = vmatprep.subr.mxu0 0.0
        %831 = vmatpush2.msra.mxu0 0.0
        %832 = vmatprep.subr.mxu0 0.0
        %833 = vmatpush2.msra.mxu0 0.0
        %834 = vmatprep.subr.mxu0 0.0
        %835 = vmatpush2.msra.mxu0 0.0
        %836 = vmatprep.subr.mxu0 0.0
        %837 = vmatpush2.msra.mxu0 0.0
        %838 = vmatprep.subr.mxu0 0.0
        %839 = vmatpush2.msra.mxu0 0.0
        %840 = vmatprep.subr.mxu0 0.0
        %841 = vmatpush2.msra.mxu0 0.0
        %842 = vmatprep.subr.mxu0 0.0
        %843 = vmatpush2.msra.mxu0 0.0
        %844 = vmatprep.mubr.f32.mxu0 0.0
        %845 = vmatmul.mubr.f32.gmra.mxu0 %v778
        %v846 = vpop.f32.mrf.mxu0
        %v847 = vadd.f32 0.0, %v846
        %v848 = vpop.f32.mrf.mxu0
        %v849 = vadd.f32 0.0, %v848
        %850 = vmatprep.mubr.f32.mxu0 0.0
        %851 = vmatmul.mubr.f32.gmra.mxu0 %v779
        %v852 = vpop.f32.mrf.mxu0
        %v853 = vadd.f32 0.0, %v852
        %v854 = vpop.f32.mrf.mxu0
        %v855 = vadd.f32 0.0, %v854
        %856 = vdwg.mxu0
        %857 = vmatprep.subr.mxu0 %v777
        %858 = vmatpush1.msra.mxu0 %v776
        %859 = vmatprep.subr.mxu0 %v773
        %860 = vmatpush1.msra.mxu0 %v772
        %861 = vmatprep.subr.mxu0 %v769
        %862 = vmatpush1.msra.mxu0 %v768
        %863 = vmatprep.subr.mxu0 %v765
        %864 = vmatpush1.msra.mxu0 %v764
        %865 = vmatprep.subr.mxu0 %v761
        %866 = vmatpush1.msra.mxu0 %v760
        %867 = vmatprep.subr.mxu0 %v757
        %868 = vmatpush1.msra.mxu0 %v756
        %869 = vmatprep.subr.mxu0 %v753
        %870 = vmatpush1.msra.mxu0 %v752
        %871 = vmatprep.subr.mxu0 %v749
        %872 = vmatpush1.msra.mxu0 %v748
        %873 = vmatprep.subr.mxu0 %v745
        %874 = vmatpush1.msra.mxu0 %v744
        %875 = vmatprep.subr.mxu0 %v741
        %876 = vmatpush1.msra.mxu0 %v740
        %877 = vmatprep.subr.mxu0 %v737
        %878 = vmatpush1.msra.mxu0 %v736
        %879 = vmatprep.subr.mxu0 %v733
        %880 = vmatpush1.msra.mxu0 %v732
        %881 = vmatprep.subr.mxu0 %v729
        %882 = vmatpush1.msra.mxu0 %v728
        %883 = vmatprep.subr.mxu0 %v725
        %884 = vmatpush1.msra.mxu0 %v724
        %885 = vmatprep.subr.mxu0 %v721
        %886 = vmatpush1.msra.mxu0 %v720
        %887 = vmatprep.subr.mxu0 %v717
        %888 = vmatpush1.msra.mxu0 %v716
        %889 = vmatprep.subr.mxu0 0.0
        %890 = vmatpush2.msra.mxu0 0.0
        %891 = vmatprep.subr.mxu0 0.0
        %892 = vmatpush2.msra.mxu0 0.0
        %893 = vmatprep.subr.mxu0 0.0
        %894 = vmatpush2.msra.mxu0 0.0
        %895 = vmatprep.subr.mxu0 0.0
        %896 = vmatpush2.msra.mxu0 0.0
        %897 = vmatprep.subr.mxu0 0.0
        %898 = vmatpush2.msra.mxu0 0.0
        %899 = vmatprep.subr.mxu0 0.0
        %900 = vmatpush2.msra.mxu0 0.0
        %901 = vmatprep.subr.mxu0 0.0
        %902 = vmatpush2.msra.mxu0 0.0
        %903 = vmatprep.subr.mxu0 0.0
        %904 = vmatpush2.msra.mxu0 0.0
        %905 = vmatprep.subr.mxu0 0.0
        %906 = vmatpush2.msra.mxu0 0.0
        %907 = vmatprep.subr.mxu0 0.0
        %908 = vmatpush2.msra.mxu0 0.0
        %909 = vmatprep.subr.mxu0 0.0
        %910 = vmatpush2.msra.mxu0 0.0
        %911 = vmatprep.subr.mxu0 0.0
        %912 = vmatpush2.msra.mxu0 0.0
        %913 = vmatprep.subr.mxu0 0.0
        %914 = vmatpush2.msra.mxu0 0.0
        %915 = vmatprep.subr.mxu0 0.0
        %916 = vmatpush2.msra.mxu0 0.0
        %917 = vmatprep.subr.mxu0 0.0
        %918 = vmatpush2.msra.mxu0 0.0
        %919 = vmatprep.subr.mxu0 0.0
        %920 = vmatpush2.msra.mxu0 0.0
        %921 = vmatprep.mubr.f32.mxu0 0.0
        %922 = vmatmul.mubr.f32.gmra.mxu0 %v778
        %v923 = vpop.f32.mrf.mxu0
        %v924 = vadd.f32 0.0, %v923
        %v925 = vpop.f32.mrf.mxu0
        %v926 = vadd.f32 0.0, %v925
        %927 = vmatprep.mubr.f32.mxu0 0.0
        %928 = vmatmul.mubr.f32.gmra.mxu0 %v779
        %v929 = vpop.f32.mrf.mxu0
        %v930 = vadd.f32 0.0, %v929
        %v931 = vpop.f32.mrf.mxu0
        %v932 = vadd.f32 0.0, %v931
        %933 = vdwg.mxu0
        %934 = vst [vmem:[%s215] sm:$0xff] %v847
        %935 = vst [vmem:[%s215 + $0x8] sm:$0xff] %v849
        %936 = vst [vmem:[%s215 + $0x10] sm:$0xff] %v924
        %937 = vst [vmem:[%s215 + $0x18] sm:$0xff] %v926
        %938 = vst [vmem:[%s215 + $0x20] sm:$0xff] %v853
        %939 = vst [vmem:[%s215 + $0x28] sm:$0xff] %v855
        %940 = vst [vmem:[%s215 + $0x30] sm:$0xff] %v930
        %941 = vst [vmem:[%s215 + $0x38] sm:$0xff] %v932
        %s942 = sand.u32 %s131, 1
        %s943 = scalar_lea.sflag [#allocation3], %s942
        %s944 = sand.u32 %s131, 1
        %s945 = smul.addr %s944, 64
        %s946 = scalar_lea.vmem [#allocation2], %s945
        // Predicated region
        $region37: #{tpu_custom_call.1} parent=35 // pred_check
          %p947 = pneg %p141
        $region38: #{tpu_custom_call.1} parent=35 // pred_check_branch
          %949 = sbr.rel (%p947) target = $region40
        $region39: #{tpu_custom_call.1} parent=35 // pred_region
          %s950 = smul.u32 4, %s23
          %s952 = ssub.s32 1024, 1024
          %953 = vsyncadd %s943, %s952
          %s954 = smul.addr %s22, 16
          %s955 = sadd.s32 %s950, %s954
          %s956 = smul.addr %s955, 128
          %s957 = scalar_lea.hbm %s4, %s956
          %s958 = sshll.u32 %s946, 4
          %s959 = int_to_ptr.vmem [resolvable:$true] %s958
          %964 = dma.vmem_to_hbm [thread:$0]  %s959, 1024, %s957, %s943, 512, 1024, 32
        $region40: #{tpu_custom_call.1} parent=35 // pred_fallthru
          _
      $region36: #{tpu_custom_call.1} parent=5 // pred_fallthru
        _
      %p965 = scmp.le.s32.totalorder 2, %s13
      // Predicated region
      $region41: #{tpu_custom_call.1} parent=5 // pred_check
        %p966 = pneg %p965
      $region42: #{tpu_custom_call.1} parent=5 // pred_check_branch
        %968 = sbr.rel (%p966) target = $region44
      $region43: #{tpu_custom_call.1} parent=5 // pred_region
        %s969 = ssub.s32 %s13, 2
        // Predicated region
        $region45: #{tpu_custom_call.1} parent=43 // pred_check
          %p970 = pneg %p147
        $region46: #{tpu_custom_call.1} parent=43 // pred_check_branch
          %972 = sbr.rel (%p970) target = $region48
        $region47: #{tpu_custom_call.1} parent=43 // pred_region
          %s973 = sand.u32 %s132, 1
          %s974 = scalar_lea.sflag [#allocation3], %s973
          %s975 = sand.u32 %s132, 1
          %s976 = smul.addr %s975, 64
          %s977 = scalar_lea.vmem [#allocation2], %s976
          %978 = dma.done %s974, 1024
        $region48: #{tpu_custom_call.1} parent=43 // pred_fallthru
          _
      $region44: #{tpu_custom_call.1} parent=5 // pred_fallthru
        _
    $region6: #{tpu_custom_call.1} parent=1 // loop_footer
      %s17 = sadd.s32 1, %s13
    $region7: #{tpu_custom_call.1} parent=1 // loop_footer_branch
      %12 = sbr.rel target = $region3
    $region8: #{tpu_custom_call.1} parent=1 // loop_exit
      _
    %979 = vsyncpa [#allocation3], 1
    %s980 = scalar_lea.sflag [#allocation3], 1
    %981 = vsyncpa %s980, 1

</llo_original>
